<compile_context>
chip_gen: v7x
topology: tpu7x:2x2x1
jax: 0.10.0
libtpu: 0.0.40
codegen_flags: <defaults>
</compile_context>

<pallas_src>
import functools

import jax
import jax.numpy as jnp
from jax.experimental import pallas as pl
from jax.experimental.pallas import tpu as pltpu


def _round_up(x, m):
    return (x + m - 1) // m * m


@functools.lru_cache(maxsize=1)
def _tpu_hw():
    """Returns (physical VMEM bytes, MXU width) with robust fallbacks."""
    kind = ""
    try:
        kind = jax.devices()[0].device_kind.lower()
    except Exception:
        pass
    vmem = None
    try:
        vmem = int(pltpu.get_tpu_info().vmem_capacity_bytes)
    except Exception:
        vmem = None
    if vmem is None:
        vmem = (64 << 20) if "v7" in kind else (128 << 20)
    mxu = 128 if "v5" in kind else 256
    return vmem, mxu


def _mlp_kernel(x_ref, wu_ref, bu_ref, wd_ref, bd_ref, o_ref, acc_ref):
    # Grid: (row tiles, hidden tiles). Hidden axis is the reduction.
    j = pl.program_id(1)
    nj = pl.num_programs(1)

    @pl.when(j == 0)
    def _():
        acc_ref[...] = jnp.zeros_like(acc_ref)

    # Cast the activation tile to the MXU dtype in-kernel; this avoids a full
    # wrapper-side HBM pass to pre-cast x (VPU has plenty of slack here).
    x_t = x_ref[...].astype(wu_ref.dtype)

    # Up projection slice: [tm, D] @ [D, th] -> [tm, th], f32 accumulate on MXU.
    h = jnp.dot(x_t, wu_ref[...], preferred_element_type=jnp.float32)
    # Bias + ReLU in f32, immediately re-packed to bf16 to feed the second MXU
    # pass (keeps the big [tm, th] intermediate at half width).
    h = jnp.maximum(h + bu_ref[...], 0.0).astype(wd_ref.dtype)

    # Partial down projection for this hidden slice: [tm, th] @ [th, D] in f32.
    partial = jnp.dot(h, wd_ref[...], preferred_element_type=jnp.float32)

    @pl.when(j < nj - 1)
    def _():
        acc_ref[...] += partial

    @pl.when(j == nj - 1)
    def _():
        # Fused epilogue: fold the last partial, the carried accumulator and
        # the down bias in a single pass over the (tm, Dp) tile.
        # TODO(synk): dropout is identity here (config.mlp_dropout=None / eval).
        o_ref[...] = (acc_ref[...] + partial + bd_ref[...]).astype(o_ref.dtype)


@functools.partial(
    jax.jit, static_argnames=("tm", "th", "compute_dtype", "out_dtype"))
def mlp_pallas(x, w_up, b_up, w_down, b_down, *, tm=None, th=None,
               compute_dtype=jnp.bfloat16, out_dtype=None):
    """relu(x @ w_up + b_up) @ w_down + b_down.

    x: [B, S, d_model] (any float dtype; cast per-tile inside the kernel).
    w_up: [d_model, hidden]; w_down: [hidden, d_model] (transpose of
    nn.Linear.weight) -- pass them pre-cast to `compute_dtype` to avoid an
    extra conversion pass.
    """
    B, S, D = x.shape
    H = w_up.shape[1]
    M = B * S
    out_dtype = compute_dtype if out_dtype is None else out_dtype

    vmem_cap, mxu = _tpu_hw()

    # --- padded / generation-aware tiling -----------------------------------
    # d_model padded to the MXU width (256 on v6e/v7x) when large enough, so
    # the up-proj K and down-proj N fill the 2x256^2 MXU; 128 otherwise.
    d_align = mxu if D > 128 else 128
    Dp = _round_up(D, d_align)

    if th is None:
        th = 512
    if tm is None:
        # Weight HBM traffic ~ 1/tm: go as big as the VMEM generation allows.
        tm = 1024 if vmem_cap >= (96 << 20) else 512

    # Clamp so tiny inputs don't over-pad; tm multiple of 16 (bf16 sublanes),
    # th multiple of 128 (lane-dense).
    tm = max(16, min(_round_up(tm, 16), _round_up(M, 16)))
    th = max(128, min(_round_up(th, 128), _round_up(H, 128)))

    x_b = jnp.dtype(x.dtype).itemsize
    w_b = jnp.dtype(compute_dtype).itemsize
    out_b = jnp.dtype(out_dtype).itemsize

    def working_set(tm_, th_):
        return (2 * tm_ * Dp * x_b        # x tile (native dtype, double-buffered)
                + 2 * Dp * th_ * w_b      # w_up slice
                + 2 * 8 * th_ * 4         # b_up slice (sublane-padded, f32)
                + 2 * th_ * Dp * w_b      # w_down slice
                + 2 * 8 * Dp * 4          # b_down
                + 2 * tm_ * Dp * out_b    # output tile
                + tm_ * Dp * 4)           # f32 accumulator scratch

    # Fit ~70% of physical VMEM; shrink th (down to 256) before tm, then tm,
    # then th to 128 as a last resort.
    budget = int(vmem_cap * 0.70)
    while working_set(tm, th) > budget and (tm > 16 or th > 128):
        if th > 256:
            th //= 2
        elif tm > 16:
            tm = max(16, _round_up(tm // 2, 16))
        else:
            th = 128

    Mp = _round_up(M, tm)
    Hp = _round_up(H, th)
    n_row = Mp // tm
    n_hid = Hp // th

    # --- operand prep --------------------------------------------------------
    # x keeps its native dtype (cast happens in-kernel).  All pads/astypes are
    # no-ops (elided by XLA) when shapes/dtypes already match, which is the
    # common transformer case with pre-cast bf16 weights.
    x2 = jnp.pad(x.reshape(M, D), ((0, Mp - M), (0, Dp - D)))
    wu = jnp.pad(w_up.astype(compute_dtype), ((0, Dp - D), (0, Hp - H)))
    wd = jnp.pad(w_down.astype(compute_dtype), ((0, Hp - H), (0, Dp - D)))
    bu = jnp.pad(b_up.astype(jnp.float32), (0, Hp - H)).reshape(1, Hp)
    bd = jnp.pad(b_down.astype(jnp.float32), (0, Dp - D)).reshape(1, Dp)

    # --- generation-aware VMEM limit -----------------------------------------
    ws = working_set(tm, th)
    vmem_limit = int(min(int(vmem_cap * 0.85), max(32 << 20, ws * 5 // 4)))
    vmem_limit = int(max(vmem_limit, ws + (2 << 20)))

    out2 = pl.pallas_call(
        _mlp_kernel,
        out_shape=jax.ShapeDtypeStruct((Mp, Dp), out_dtype),
        grid_spec=pltpu.PrefetchScalarGridSpec(
            num_scalar_prefetch=0,
            grid=(n_row, n_hid),
            in_specs=[
                pl.BlockSpec((tm, Dp), lambda i, j: (i, 0)),   # x rows tile
                pl.BlockSpec((Dp, th), lambda i, j: (0, j)),   # w_up slice
                pl.BlockSpec((1, th), lambda i, j: (0, j)),    # up-bias slice
                pl.BlockSpec((th, Dp), lambda i, j: (j, 0)),   # w_down slice
                pl.BlockSpec((1, Dp), lambda i, j: (0, 0)),    # down bias
            ],
            out_specs=pl.BlockSpec((tm, Dp), lambda i, j: (i, 0)),
            scratch_shapes=[pltpu.VMEM((tm, Dp), jnp.float32)],
        ),
        compiler_params=pltpu.CompilerParams(
            dimension_semantics=("parallel", "arbitrary"),
            vmem_limit_bytes=vmem_limit),
    )(x2, wu, bu, wd, bd)

    return out2[:M, :D].reshape(B, S, D)


def mlp_reference(x, w_up, b_up, w_down, b_down):
    h = jnp.maximum(jnp.einsum("bsd,dh->bsh", x, w_up) + b_up, 0.0)
    return jnp.einsum("bsh,hd->bsd", h, w_down) + b_down


if __name__ == "__main__":
    # Config: d_model=32, hidden_dim=None -> 4*int(2*32/3)=84 -> round up to
    # multiple of 4 -> 84; activation_fn="relu"; mlp_bias=True; mlp_dropout=None.
    batch, seq, d_model = 2, 8, 32
    hidden_dim = 4 * int(2 * d_model / 3)
    hidden_dim = 4 * ((hidden_dim + 4 - 1) // 4)   # = 84

    key = jax.random.PRNGKey(0)
    kx, k1, k2, k3, k4 = jax.random.split(key, 5)
    x = jax.random.normal(kx, (batch, seq, d_model), dtype=jnp.float32)

    # Deterministic parameter init (nn.Linear-style uniform bounds).
    bound_up = 1.0 / (d_model ** 0.5)
    bound_dn = 1.0 / (hidden_dim ** 0.5)
    w_up = jax.random.uniform(k1, (d_model, hidden_dim), jnp.float32,
                              -bound_up, bound_up)
    b_up = jax.random.uniform(k2, (hidden_dim,), jnp.float32,
                              -bound_up, bound_up)
    w_down = jax.random.uniform(k3, (hidden_dim, d_model), jnp.float32,
                                -bound_dn, bound_dn)
    b_down = jax.random.uniform(k4, (d_model,), jnp.float32,
                                -bound_dn, bound_dn)

    # Pre-cast weights once (outside the per-call jit) so the kernel wrapper
    # does no extra HBM conversion pass over them per call.
    w_up_c = w_up.astype(jnp.bfloat16)
    w_down_c = w_down.astype(jnp.bfloat16)

    out = mlp_pallas(x, w_up_c, b_up, w_down_c, b_down)
    out = jax.block_until_ready(out)

    ref = mlp_reference(x, w_up, b_up, w_down, b_down)
    assert out.shape == (batch, seq, d_model)
    # bf16 MXU operands / bf16 output (f32 accumulate) -> compare against the
    # f32 reference with a bf16-appropriate tolerance.
    assert jnp.allclose(out.astype(jnp.float32), ref, atol=2e-2, rtol=2e-2), \
        "mismatch vs reference"
    print("KERNEL_OK")
</pallas_src>

<mosaic_0001>
module attributes {stable_mosaic.version = 11 : i64} {
  func.func @_mlp_kernel(%arg0: i32, %arg1: i32, %arg2: memref<16x128xf32, #tpu.memory_space<vmem>>, %arg3: memref<128x128xbf16, #tpu.memory_space<vmem>>, %arg4: memref<1x128xf32, #tpu.memory_space<vmem>>, %arg5: memref<128x128xbf16, #tpu.memory_space<vmem>>, %arg6: memref<1x128xf32, #tpu.memory_space<vmem>>, %arg7: memref<16x128xbf16, #tpu.memory_space<vmem>>, %arg8: memref<16x128xf32, #tpu.memory_space<vmem>>) attributes {dimension_semantics = [#tpu.dimension_semantics<parallel>, #tpu.dimension_semantics<arbitrary>], iteration_bounds = array<i64: 1, 1>, scalar_prefetch = 0 : i64, scratch_operands = 1 : i64, tpu.core_type = #tpu.core_type<tc>, window_params = [{transform_indices = @transform_0, window_bounds = array<i64: 16, 128>}, {transform_indices = @transform_1, window_bounds = array<i64: 128, 128>}, {transform_indices = @transform_2, window_bounds = array<i64: 1, 128>}, {transform_indices = @transform_3, window_bounds = array<i64: 128, 128>}, {pipeline_mode = #tpu.pipeline_mode<synchronous>, transform_indices = @transform_4, window_bounds = array<i64: 1, 128>}, {transform_indices = @transform_5, window_bounds = array<i64: 16, 128>}]} {
    %c0_i32 = arith.constant 0 : i32
    %0 = arith.cmpi eq, %arg1, %c0_i32 : i32
    %1 = arith.extui %0 : i1 to i32
    %c0_i32_0 = arith.constant 0 : i32
    %2 = arith.cmpi ne, %1, %c0_i32_0 : i32
    scf.if %2 {
      %cst_14 = arith.constant 0.000000e+00 : f32
      %21 = vector.broadcast %cst_14 : f32 to vector<16x128xf32>
      %c0_15 = arith.constant 0 : index
      %c0_16 = arith.constant 0 : index
      %22 = vector.load %arg8[%c0_15, %c0_16] : memref<16x128xf32, #tpu.memory_space<vmem>>, vector<16x128xf32>
      tpu.vector_store %arg8[%c0_15, %c0_16], %21 {strides = array<i32>} : memref<16x128xf32, #tpu.memory_space<vmem>>, vector<16x128xf32>,
    } else {
    }
    %c0 = arith.constant 0 : index
    %c0_1 = arith.constant 0 : index
    %3 = vector.load %arg2[%c0, %c0_1] : memref<16x128xf32, #tpu.memory_space<vmem>>, vector<16x128xf32>
    %4 = arith.truncf %3 : vector<16x128xf32> to vector<16x128xbf16>
    %c0_2 = arith.constant 0 : index
    %c0_3 = arith.constant 0 : index
    %5 = vector.load %arg3[%c0_2, %c0_3] : memref<128x128xbf16, #tpu.memory_space<vmem>>, vector<128x128xbf16>
    %cst = arith.constant dense<0.000000e+00> : vector<16x128xf32>
    %6 = tpu.matmul %4, %5, %cst {dimension_numbers = #tpu.dot_dimension_numbers<[1], [0], [0], [1], [0, 0, 1, 1], [], []>} : vector<16x128xbf16>, vector<128x128xbf16>, vector<16x128xf32> -> vector<16x128xf32>
    %c0_4 = arith.constant 0 : index
    %c0_5 = arith.constant 0 : index
    %7 = vector.load %arg4[%c0_4, %c0_5] : memref<1x128xf32, #tpu.memory_space<vmem>>, vector<1x128xf32>
    %8 = vector.broadcast %7 : vector<1x128xf32> to vector<16x128xf32>
    %9 = arith.addf %6, %8 : vector<16x128xf32>
    %cst_6 = arith.constant 0.000000e+00 : f32
    %10 = vector.broadcast %cst_6 : f32 to vector<16x128xf32>
    %11 = arith.maximumf %9, %10 : vector<16x128xf32>
    %12 = arith.truncf %11 : vector<16x128xf32> to vector<16x128xbf16>
    %c0_7 = arith.constant 0 : index
    %c0_8 = arith.constant 0 : index
    %13 = vector.load %arg5[%c0_7, %c0_8] : memref<128x128xbf16, #tpu.memory_space<vmem>>, vector<128x128xbf16>
    %cst_9 = arith.constant dense<0.000000e+00> : vector<16x128xf32>
    %14 = tpu.matmul %12, %13, %cst_9 {dimension_numbers = #tpu.dot_dimension_numbers<[1], [0], [0], [1], [0, 0, 1, 1], [], []>} : vector<16x128xbf16>, vector<128x128xbf16>, vector<16x128xf32> -> vector<16x128xf32>
    %c0_i32_10 = arith.constant 0 : i32
    %15 = arith.cmpi slt, %arg1, %c0_i32_10 : i32
    %16 = arith.extui %15 : i1 to i32
    %c0_i32_11 = arith.constant 0 : i32
    %17 = arith.cmpi ne, %16, %c0_i32_11 : i32
    scf.if %17 {
      %c0_14 = arith.constant 0 : index
      %c0_15 = arith.constant 0 : index
      %21 = vector.load %arg8[%c0_14, %c0_15] : memref<16x128xf32, #tpu.memory_space<vmem>>, vector<16x128xf32>
      %22 = arith.addf %21, %14 : vector<16x128xf32>
      %c0_16 = arith.constant 0 : index
      %c0_17 = arith.constant 0 : index
      %23 = vector.load %arg8[%c0_16, %c0_17] : memref<16x128xf32, #tpu.memory_space<vmem>>, vector<16x128xf32>
      tpu.vector_store %arg8[%c0_16, %c0_17], %22 {strides = array<i32>} : memref<16x128xf32, #tpu.memory_space<vmem>>, vector<16x128xf32>,
    } else {
    }
    %c0_i32_12 = arith.constant 0 : i32
    %18 = arith.cmpi eq, %arg1, %c0_i32_12 : i32
    %19 = arith.extui %18 : i1 to i32
    %c0_i32_13 = arith.constant 0 : i32
    %20 = arith.cmpi ne, %19, %c0_i32_13 : i32
    scf.if %20 {
      %c0_14 = arith.constant 0 : index
      %c0_15 = arith.constant 0 : index
      %21 = vector.load %arg8[%c0_14, %c0_15] : memref<16x128xf32, #tpu.memory_space<vmem>>, vector<16x128xf32>
      %22 = arith.addf %21, %14 : vector<16x128xf32>
      %c0_16 = arith.constant 0 : index
      %c0_17 = arith.constant 0 : index
      %23 = vector.load %arg6[%c0_16, %c0_17] : memref<1x128xf32, #tpu.memory_space<vmem>>, vector<1x128xf32>
      %24 = vector.broadcast %23 : vector<1x128xf32> to vector<16x128xf32>
      %25 = arith.addf %22, %24 : vector<16x128xf32>
      %26 = arith.truncf %25 : vector<16x128xf32> to vector<16x128xbf16>
      %c0_18 = arith.constant 0 : index
      %c0_19 = arith.constant 0 : index
      %27 = vector.load %arg7[%c0_18, %c0_19] : memref<16x128xbf16, #tpu.memory_space<vmem>>, vector<16x128xbf16>
      tpu.vector_store %arg7[%c0_18, %c0_19], %26 {strides = array<i32>} : memref<16x128xbf16, #tpu.memory_space<vmem>>, vector<16x128xbf16>,
    } else {
    }
    return
  }
  func.func @transform_0(%arg0: i32, %arg1: i32) -> (i32, i32) {
    %c0_i32 = arith.constant 0 : i32
    %c0_i32_0 = arith.constant 0 : i32
    return %arg0, %c0_i32 : i32, i32
  }
  func.func @transform_1(%arg0: i32, %arg1: i32) -> (i32, i32) {
    %c0_i32 = arith.constant 0 : i32
    %c0_i32_0 = arith.constant 0 : i32
    return %c0_i32, %arg1 : i32, i32
  }
  func.func @transform_2(%arg0: i32, %arg1: i32) -> (i32, i32) {
    %c0_i32 = arith.constant 0 : i32
    %c0_i32_0 = arith.constant 0 : i32
    return %c0_i32, %arg1 : i32, i32
  }
  func.func @transform_3(%arg0: i32, %arg1: i32) -> (i32, i32) {
    %c0_i32 = arith.constant 0 : i32
    %c0_i32_0 = arith.constant 0 : i32
    return %arg1, %c0_i32 : i32, i32
  }
  func.func @transform_4(%arg0: i32, %arg1: i32) -> (i32, i32) {
    %c0_i32 = arith.constant 0 : i32
    %c0_i32_0 = arith.constant 0 : i32
    %c0_i32_1 = arith.constant 0 : i32
    return %c0_i32, %c0_i32_0 : i32, i32
  }
  func.func @transform_5(%arg0: i32, %arg1: i32) -> (i32, i32) {
    %c0_i32 = arith.constant 0 : i32
    %c0_i32_0 = arith.constant 0 : i32
    return %arg0, %c0_i32 : i32, i32
  }
}

</mosaic_0001>

<llo_original>
// kernel: mlp_pallas.1
$region0: #{mlp_pallas.1}
  #allocation0 [shape = 'u32[]', space=smem, size = 0x4, offset = 0x4, fixed_abs, tag = 'smem constant byte address 0x4 - core index']
  #allocation1 [shape = 'u32[144,128]{1,0:T(1,128)}', space=vmem, size = 0x12000, scoped, tag = 'internal scratch']
  #allocation2 [shape = 'f32[16,128]{1,0:T(8,128)}', space=vmem, size = 0x2000, scoped, tag = 'scratch operand']
  %s0 = inlined_call_operand.vmem [shape: f32[16,128], index: 0, kind: input, shape index: {}]
  %s1 = inlined_call_operand.vmem [shape: bf16[128,128], index: 1, kind: input, shape index: {}]
  %s2 = inlined_call_operand.vmem [shape: f32[1,128], index: 2, kind: input, shape index: {}]
  %s3 = inlined_call_operand.vmem [shape: bf16[128,128], index: 3, kind: input, shape index: {}]
  %s4 = inlined_call_operand.vmem [shape: f32[1,128], index: 4, kind: input, shape index: {}]
  %s5 = inlined_call_operand.vmem [shape: bf16[16,128], index: 5, kind: output, shape index: {}]
  %s6 = sld [smem:[#allocation0]]
  $region42: #{mlp_pallas.1} parent=0
    _
  %s8 = ssub.s32 1, %s6
  %s9 = scalar_select 0, %s8, %s6
  // Predicated region
  $region2: #{mlp_pallas.1} parent=0 // pred_check
    _
  $region3: #{mlp_pallas.1} parent=0 // pred_check_branch
    %11 = sbr.rel (0) target = $region5
  $region4: #{mlp_pallas.1} parent=0 // pred_region
    _
  $region5: #{mlp_pallas.1} parent=0 // pred_fallthru
    _
  // Predicated region
  $region6: #{mlp_pallas.1} parent=0 // pred_check
    _
  $region7: #{mlp_pallas.1} parent=0 // pred_check_branch
    %13 = sbr.rel (0) target = $region9
  $region8: #{mlp_pallas.1} parent=0 // pred_region
    _
  $region9: #{mlp_pallas.1} parent=0 // pred_fallthru
    _
  // Predicated region
  $region10: #{mlp_pallas.1} parent=0 // pred_check
    _
  $region11: #{mlp_pallas.1} parent=0 // pred_check_branch
    %15 = sbr.rel (0) target = $region13
  $region12: #{mlp_pallas.1} parent=0 // pred_region
    _
  $region13: #{mlp_pallas.1} parent=0 // pred_fallthru
    _
  // Predicated region
  $region14: #{mlp_pallas.1} parent=0 // pred_check
    _
  $region15: #{mlp_pallas.1} parent=0 // pred_check_branch
    %17 = sbr.rel (0) target = $region17
  $region16: #{mlp_pallas.1} parent=0 // pred_region
    _
  $region17: #{mlp_pallas.1} parent=0 // pred_fallthru
    _
  // Predicated region
  $region18: #{mlp_pallas.1} parent=0 // pred_check
    _
  $region19: #{mlp_pallas.1} parent=0 // pred_check_branch
    %19 = sbr.rel (0) target = $region21
  $region20: #{mlp_pallas.1} parent=0 // pred_region
    _
  $region21: #{mlp_pallas.1} parent=0 // pred_fallthru
    _
  %p21 = scmp.eq.s32.totalorder 0, 0
  // Predicated region
  $region22: #{mlp_pallas.1} parent=0 // pred_check
    %p22 = pneg %p21
  $region23: #{mlp_pallas.1} parent=0 // pred_check_branch
    %24 = sbr.rel (%p22) target = $region25
  $region24: #{mlp_pallas.1} parent=0 // pred_region
    %25 = vst [vmem:[#allocation2] sm:$0xff] 0.0
    %26 = vst [vmem:[#allocation2 + $0x8] sm:$0xff] 0.0
  $region25: #{mlp_pallas.1} parent=0 // pred_fallthru
    _
  %v27 = vld [vmem:[%s0] sm:$0xff]
  %v28 = vld [vmem:[%s0 + $0x8] sm:$0xff]
  %v29 = vpack.c.bf16 %v28, %v27
  %v30 = vld [vmem:[%s1] sm:$0xf]
  %v31 = vld [vmem:[%s1 + $0x4] sm:$0xf]
  %v32 = vld [vmem:[%s1 + $0x8] sm:$0xf]
  %v33 = vld [vmem:[%s1 + $0xc] sm:$0xf]
  %v34 = vld [vmem:[%s1 + $0x10] sm:$0xf]
  %v35 = vld [vmem:[%s1 + $0x14] sm:$0xf]
  %v36 = vld [vmem:[%s1 + $0x18] sm:$0xf]
  %v37 = vld [vmem:[%s1 + $0x1c] sm:$0xf]
  %v38 = vld [vmem:[%s1 + $0x20] sm:$0xf]
  %v39 = vld [vmem:[%s1 + $0x24] sm:$0xf]
  %v40 = vld [vmem:[%s1 + $0x28] sm:$0xf]
  %v41 = vld [vmem:[%s1 + $0x2c] sm:$0xf]
  %v42 = vld [vmem:[%s1 + $0x30] sm:$0xf]
  %v43 = vld [vmem:[%s1 + $0x34] sm:$0xf]
  %v44 = vld [vmem:[%s1 + $0x38] sm:$0xf]
  %v45 = vld [vmem:[%s1 + $0x3c] sm:$0xf]
  %v46 = vld [vmem:[%s2] sm:$0x1]
  %v48 = vlaneseq
  %v49 = vshrl.u32 %v48, 7
  %v50 = vsub.s32 0, %v49
  %v51 = vrot.slane %v46, %v50
  %v69 = vunpack.c.l.b16 %v30
  %v70 = vunpack.c.l.b16 %v31
  %v71 = vunpack.c.l.b16 %v32
  %v72 = vunpack.c.l.b16 %v33
  %v73 = vunpack.c.l.b16 %v34
  %v74 = vunpack.c.l.b16 %v35
  %v75 = vunpack.c.l.b16 %v36
  %v76 = vunpack.c.l.b16 %v37
  %v77 = vunpack.c.l.b16 %v38
  %v78 = vunpack.c.l.b16 %v39
  %v79 = vunpack.c.l.b16 %v40
  %v80 = vunpack.c.l.b16 %v41
  %v81 = vunpack.c.l.b16 %v42
  %v82 = vunpack.c.l.b16 %v43
  %v83 = vunpack.c.l.b16 %v44
  %v84 = vunpack.c.l.b16 %v45
  %v85 = vpack.c.b16 %v70, %v69
  %v86 = vpack.c.b16 %v72, %v71
  %v87 = vpack.c.b16 %v74, %v73
  %v88 = vpack.c.b16 %v76, %v75
  %v89 = vpack.c.b16 %v78, %v77
  %v90 = vpack.c.b16 %v80, %v79
  %v91 = vpack.c.b16 %v82, %v81
  %v92 = vpack.c.b16 %v84, %v83
  %101 = vmatprep.subr.bf16.mxu0 0
  %102 = vmatpush1.bf16.msra.mxu0 %v85
  %103 = vmatprep.subr.bf16.mxu0 0
  %104 = vmatpush1.bf16.msra.mxu0 %v86
  %105 = vmatprep.subr.bf16.mxu0 0
  %106 = vmatpush1.bf16.msra.mxu0 %v87
  %107 = vmatprep.subr.bf16.mxu0 0
  %108 = vmatpush1.bf16.msra.mxu0 %v88
  %109 = vmatprep.subr.bf16.mxu0 0
  %110 = vmatpush1.bf16.msra.mxu0 %v89
  %111 = vmatprep.subr.bf16.mxu0 0
  %112 = vmatpush1.bf16.msra.mxu0 %v90
  %113 = vmatprep.subr.bf16.mxu0 0
  %114 = vmatpush1.bf16.msra.mxu0 %v91
  %115 = vmatprep.subr.bf16.mxu0 0
  %116 = vmatpush1.bf16.msra.mxu0 %v92
  %117 = vmatprep.subr.bf16.mxu0 0
  %118 = vmatpush1.bf16.msra.mxu0 0
  %119 = vmatprep.subr.bf16.mxu0 0
  %120 = vmatpush1.bf16.msra.mxu0 0
  %121 = vmatprep.subr.bf16.mxu0 0
  %122 = vmatpush1.bf16.msra.mxu0 0
  %123 = vmatprep.subr.bf16.mxu0 0
  %124 = vmatpush1.bf16.msra.mxu0 0
  %125 = vmatprep.subr.bf16.mxu0 0
  %126 = vmatpush1.bf16.msra.mxu0 0
  %127 = vmatprep.subr.bf16.mxu0 0
  %128 = vmatpush1.bf16.msra.mxu0 0
  %129 = vmatprep.subr.bf16.mxu0 0
  %130 = vmatpush1.bf16.msra.mxu0 0
  %131 = vmatprep.subr.bf16.mxu0 0
  %132 = vmatpush1.bf16.msra.mxu0 0
  %133 = vmatprep.mubr.bf16.mxu0 0
  %134 = vmatmul.mubr.bf16.gmra.mrb[0].mxu0 %v29
  %v135 = vpop.f32.mrb[0].mxu0
  %v136 = vadd.f32 %v51, %v135
  %v137 = vpop.f32.mrb[0].mxu0
  %v138 = vpop.f32.mrb[0].mxu0
  %v139 = vadd.f32 %v51, %v138
  %v140 = vpop.f32.mrb[0].mxu0
  %141 = vdwg.mxu0
  %v142 = vmax.f32 %v136, 0.0
  %v143 = vmax.f32 %v139, 0.0
  %v144 = vpack.c.bf16 %v143, %v142
  %v145 = vld [vmem:[%s3] sm:$0xf]
  %v146 = vld [vmem:[%s3 + $0x4] sm:$0xf]
  %v147 = vld [vmem:[%s3 + $0x8] sm:$0xf]
  %v148 = vld [vmem:[%s3 + $0xc] sm:$0xf]
  %v149 = vld [vmem:[%s3 + $0x10] sm:$0xf]
  %v150 = vld [vmem:[%s3 + $0x14] sm:$0xf]
  %v151 = vld [vmem:[%s3 + $0x18] sm:$0xf]
  %v152 = vld [vmem:[%s3 + $0x1c] sm:$0xf]
  %v153 = vld [vmem:[%s3 + $0x20] sm:$0xf]
  %v154 = vld [vmem:[%s3 + $0x24] sm:$0xf]
  %v155 = vld [vmem:[%s3 + $0x28] sm:$0xf]
  %v156 = vld [vmem:[%s3 + $0x2c] sm:$0xf]
  %v157 = vld [vmem:[%s3 + $0x30] sm:$0xf]
  %v158 = vld [vmem:[%s3 + $0x34] sm:$0xf]
  %v159 = vld [vmem:[%s3 + $0x38] sm:$0xf]
  %v160 = vld [vmem:[%s3 + $0x3c] sm:$0xf]
  %v177 = vunpack.c.l.b16 %v145
  %v178 = vunpack.c.l.b16 %v146
  %v179 = vunpack.c.l.b16 %v147
  %v180 = vunpack.c.l.b16 %v148
  %v181 = vunpack.c.l.b16 %v149
  %v182 = vunpack.c.l.b16 %v150
  %v183 = vunpack.c.l.b16 %v151
  %v184 = vunpack.c.l.b16 %v152
  %v185 = vunpack.c.l.b16 %v153
  %v186 = vunpack.c.l.b16 %v154
  %v187 = vunpack.c.l.b16 %v155
  %v188 = vunpack.c.l.b16 %v156
  %v189 = vunpack.c.l.b16 %v157
  %v190 = vunpack.c.l.b16 %v158
  %v191 = vunpack.c.l.b16 %v159
  %v192 = vunpack.c.l.b16 %v160
  %v193 = vpack.c.b16 %v178, %v177
  %v194 = vpack.c.b16 %v180, %v179
  %v195 = vpack.c.b16 %v182, %v181
  %v196 = vpack.c.b16 %v184, %v183
  %v197 = vpack.c.b16 %v186, %v185
  %v198 = vpack.c.b16 %v188, %v187
  %v199 = vpack.c.b16 %v190, %v189
  %v200 = vpack.c.b16 %v192, %v191
  %209 = vmatprep.subr.bf16.mxu0 0
  %210 = vmatpush1.bf16.msra.mxu0 %v193
  %211 = vmatprep.subr.bf16.mxu0 0
  %212 = vmatpush1.bf16.msra.mxu0 %v194
  %213 = vmatprep.subr.bf16.mxu0 0
  %214 = vmatpush1.bf16.msra.mxu0 %v195
  %215 = vmatprep.subr.bf16.mxu0 0
  %216 = vmatpush1.bf16.msra.mxu0 %v196
  %217 = vmatprep.subr.bf16.mxu0 0
  %218 = vmatpush1.bf16.msra.mxu0 %v197
  %219 = vmatprep.subr.bf16.mxu0 0
  %220 = vmatpush1.bf16.msra.mxu0 %v198
  %221 = vmatprep.subr.bf16.mxu0 0
  %222 = vmatpush1.bf16.msra.mxu0 %v199
  %223 = vmatprep.subr.bf16.mxu0 0
  %224 = vmatpush1.bf16.msra.mxu0 %v200
  %225 = vmatprep.subr.bf16.mxu0 0
  %226 = vmatpush1.bf16.msra.mxu0 0
  %227 = vmatprep.subr.bf16.mxu0 0
  %228 = vmatpush1.bf16.msra.mxu0 0
  %229 = vmatprep.subr.bf16.mxu0 0
  %230 = vmatpush1.bf16.msra.mxu0 0
  %231 = vmatprep.subr.bf16.mxu0 0
  %232 = vmatpush1.bf16.msra.mxu0 0
  %233 = vmatprep.subr.bf16.mxu0 0
  %234 = vmatpush1.bf16.msra.mxu0 0
  %235 = vmatprep.subr.bf16.mxu0 0
  %236 = vmatpush1.bf16.msra.mxu0 0
  %237 = vmatprep.subr.bf16.mxu0 0
  %238 = vmatpush1.bf16.msra.mxu0 0
  %239 = vmatprep.subr.bf16.mxu0 0
  %240 = vmatpush1.bf16.msra.mxu0 0
  %241 = vmatprep.mubr.bf16.mxu0 0
  %242 = vmatmul.mubr.bf16.gmra.mrb[0].mxu0 %v144
  %v243 = vpop.f32.mrb[0].mxu0
  %v244 = vadd.f32 0.0, %v243
  %v245 = vpop.f32.mrb[0].mxu0
  %v246 = vpop.f32.mrb[0].mxu0
  %v247 = vadd.f32 0.0, %v246
  %v248 = vpop.f32.mrb[0].mxu0
  %249 = vdwg.mxu0
  %p250 = scmp.lt.s32.totalorder 0, 0
  // Predicated region
  $region26: #{mlp_pallas.1} parent=0 // pred_check
    %p251 = pneg %p250
  $region27: #{mlp_pallas.1} parent=0 // pred_check_branch
    %253 = sbr.rel (%p251) target = $region29
  $region28: #{mlp_pallas.1} parent=0 // pred_region
    %v254 = vld [vmem:[#allocation2] sm:$0xff]
    %v255 = vld [vmem:[#allocation2 + $0x8] sm:$0xff]
    %v256 = vadd.f32 %v254, %v244
    %v257 = vadd.f32 %v255, %v247
    %258 = vst [vmem:[#allocation2] sm:$0xff] %v256
    %259 = vst [vmem:[#allocation2 + $0x8] sm:$0xff] %v257
  $region29: #{mlp_pallas.1} parent=0 // pred_fallthru
    _
  // Predicated region
  $region30: #{mlp_pallas.1} parent=0 // pred_check
    %p260 = pneg %p21
  $region31: #{mlp_pallas.1} parent=0 // pred_check_branch
    %262 = sbr.rel (%p260) target = $region33
  $region32: #{mlp_pallas.1} parent=0 // pred_region
    %v263 = vld [vmem:[#allocation2] sm:$0xff]
    %v264 = vld [vmem:[#allocation2 + $0x8] sm:$0xff]
    %v265 = vadd.f32 %v263, %v244
    %v266 = vadd.f32 %v264, %v247
    %v267 = vld [vmem:[%s4] sm:$0x1]
    %v269 = vlaneseq
    %v270 = vshrl.u32 %v269, 7
    %v271 = vsub.s32 0, %v270
    %v272 = vrot.slane %v267, %v271
    %v274 = vadd.f32 %v265, %v272
    %v275 = vadd.f32 %v266, %v272
    %v276 = vpack.c.bf16 %v275, %v274
    %v278 = vunpack.c.l.b16 %v276
    %v279 = vunpack.c.h.b16 %v276
    %v280 = vpack.c.b16 %v278, %v278
    %v281 = vpack.c.b16 %v279, %v279
    %284 = vst [vmem:[%s5] sm:$0xf] %v280
    %285 = vst [vmem:[%s5 + $0x4] sm:$0xf] %v281
  $region33: #{mlp_pallas.1} parent=0 // pred_fallthru
    _
  // Predicated region
  $region34: #{mlp_pallas.1} parent=0 // pred_check
    _
  $region35: #{mlp_pallas.1} parent=0 // pred_check_branch
    %287 = sbr.rel (0) target = $region37
  $region36: #{mlp_pallas.1} parent=0 // pred_region
    _
  $region37: #{mlp_pallas.1} parent=0 // pred_fallthru
    _
  // Predicated region
  $region38: #{mlp_pallas.1} parent=0 // pred_check
    _
  $region39: #{mlp_pallas.1} parent=0 // pred_check_branch
    %289 = sbr.rel (0) target = $region41
  $region40: #{mlp_pallas.1} parent=0 // pred_region
    _
  $region41: #{mlp_pallas.1} parent=0 // pred_fallthru
    _

</llo_original>
